<compile_context>
chip_gen: v7x
topology: tpu7x:2x2x1
jax: 0.10.0
libtpu: 0.0.40
codegen_flags: <defaults>
</compile_context>

<pallas_src>
import functools

import jax
import jax.numpy as jnp
from jax.experimental import pallas as pl
from jax.experimental.pallas import tpu as pltpu

_LANE = 128
_SUB = 16                      # sublane rows each sample is folded into
_MAX_CHUNK_LANES = 4096        # lanes per grid step (per folded row)
_MAX_ROWS = 64                 # rows per grid step (vreg-pressure cap)
_MAX_TILE_ELEMS = 256 * 1024   # per-input per-step element cap (1 MiB f32)
_NEG_PAD = -3.0e4              # sigmoid(-3e4) == 0 exactly; bf16-representable


def _round_up(x, m):
    return ((x + m - 1) // m) * m


def _cdiv(a, b):
    return -(-a // b)


def _largest_divisor_leq(n, cap):
    cap = max(1, min(n, cap))
    for d in range(cap, 0, -1):
        if n % d == 0:
            return d
    return 1


def _iou_loss_kernel(pred_ref, target_ref, out_ref, inter_acc, total_acc, *,
                     sblk, n_lb):
    """Grid: (N // sblk, num_chunks).

    pred_ref/target_ref : (sblk*16, chunk) tile (sblk samples, HW folded rows)
    out_ref             : (1, sblk, 128) per-sample-group loss block
    inter_acc/total_acc : (sblk*16, 128) f32 lane-block partial-sum scratch
    """
    rows = sblk * _SUB
    k = pl.program_id(1)

    @pl.when(k == 0)
    def _():
        inter_acc[...] = jnp.zeros_like(inter_acc)
        total_acc[...] = jnp.zeros_like(total_acc)

    # Per-step work: sigmoid + elementwise, reduced lane-block-wise into a
    # small vreg-resident partial sum (pure VALU; no per-block VMEM RMW).
    i_part = jnp.zeros((rows, _LANE), jnp.float32)
    t_part = jnp.zeros((rows, _LANE), jnp.float32)
    for j in range(n_lb):
        sl = slice(j * _LANE, (j + 1) * _LANE)     # static, lane-tile aligned
        pj = jax.nn.sigmoid(pred_ref[:, sl].astype(jnp.float32))
        tj = target_ref[:, sl].astype(jnp.float32)
        i_part = i_part + pj * tj
        t_part = t_part + (pj + tj)
    inter_acc[...] += i_part
    total_acc[...] += t_part

    @pl.when(k == pl.num_programs(1) - 1)
    def _():
        # Once per sample group: segmented cross-lane/sublane reduce + IoU.
        for s in range(sblk):
            rs = slice(s * _SUB, (s + 1) * _SUB)   # static, sublane aligned
            intersection = jnp.sum(inter_acc[rs, :])
            total = jnp.sum(total_acc[rs, :])
            union = total - intersection
            loss = 1.0 - intersection / (union + 1e-6)
            out_ref[:, s:s + 1, :] = jnp.full((1, 1, _LANE), loss,
                                              dtype=out_ref.dtype)


def sod_iou_loss(pred, target, *, loss_weight=1.0, reduction="mean",
                 max_chunk_lanes=_MAX_CHUNK_LANES):
    """Pallas implementation of SODIoULoss.forward (weight=None, avg_factor=None).

    pred   : (N, C, H, W) logits, C must be 1
    target : (N, H, W)
    """
    # TODO(synk): sample-wise `weight` / `avg_factor` (mmseg weight_reduce_loss)
    # are not implemented; only the default weight=None, avg_factor=None path.
    assert reduction in ("mean", "sum", "none")
    N, C, H, W = pred.shape
    assert C == 1, "original IoU loss broadcast requires C == 1"
    hw = C * H * W
    max_chunk = max(_LANE, (max_chunk_lanes // _LANE) * _LANE)

    # --- layout: fold each sample's HW into _SUB sublane rows ----------------
    if hw % (_SUB * _LANE) == 0:
        # Fast path (256^2, 320^2, 384^2, 512^2, ...): pure metadata reshape,
        # no cast / pad / copy, no masking needed.
        per_row = hw // _SUB
        nlb_total = per_row // _LANE
        nlb_chunk = _largest_divisor_leq(nlb_total, max_chunk // _LANE)
        chunk = nlb_chunk * _LANE
        num_chunks = nlb_total // nlb_chunk
        pred_rows = pred.reshape(N * _SUB, per_row)
        target_rows = target.reshape(N * _SUB, per_row)
    else:
        # Ragged path: pad pred with a large negative constant (sigmoid -> 0
        # exactly) and target with 0, so padded elements are self-neutralizing
        # and the kernel needs no mask.
        per_row_raw = _cdiv(hw, _SUB)
        num_chunks = max(1, _cdiv(per_row_raw, max_chunk))
        chunk = _round_up(_cdiv(per_row_raw, num_chunks), _LANE)
        per_row = num_chunks * chunk
        hw_pad = _SUB * per_row
        pad = hw_pad - hw
        pred_flat = jnp.pad(pred.reshape(N, hw), ((0, 0), (0, pad)),
                            constant_values=_NEG_PAD)
        target_flat = jnp.pad(target.reshape(N, hw), ((0, 0), (0, pad)))
        pred_rows = pred_flat.reshape(N * _SUB, per_row)
        target_rows = target_flat.reshape(N * _SUB, per_row)

    # --- samples per grid step (amortize ~0.35us per-step overhead) ----------
    max_rows_by_elems = max(_SUB, ((_MAX_TILE_ELEMS // chunk) // _SUB) * _SUB)
    max_rows = min(_MAX_ROWS, max_rows_by_elems)
    sblk = _largest_divisor_leq(N, max_rows // _SUB)
    rows = sblk * _SUB
    n_blocks = N // sblk

    kernel = functools.partial(_iou_loss_kernel, sblk=sblk,
                               n_lb=chunk // _LANE)

    out = pl.pallas_call(
        kernel,
        out_shape=jax.ShapeDtypeStruct((n_blocks, sblk, _LANE), jnp.float32),
        grid_spec=pltpu.PrefetchScalarGridSpec(
            num_scalar_prefetch=0,
            grid=(n_blocks, num_chunks),
            in_specs=[
                pl.BlockSpec((rows, chunk), lambda i, k: (i, k)),
                pl.BlockSpec((rows, chunk), lambda i, k: (i, k)),
            ],
            out_specs=pl.BlockSpec((1, sblk, _LANE), lambda i, k: (i, 0, 0)),
            scratch_shapes=[
                pltpu.VMEM((rows, _LANE), jnp.float32),
                pltpu.VMEM((rows, _LANE), jnp.float32),
            ],
        ),
        compiler_params=pltpu.CompilerParams(
            dimension_semantics=("parallel", "arbitrary"),
            vmem_limit_bytes=32 * 1024 * 1024,
        ),
    )(pred_rows, target_rows)

    per_sample_loss = out[:, :, 0].reshape(N)       # (N,)
    if reduction == "mean":
        red = jnp.mean(per_sample_loss)
    elif reduction == "sum":
        red = jnp.sum(per_sample_loss)
    else:
        red = per_sample_loss
    return loss_weight * red


def _reference_iou_loss(pred, target, loss_weight=1.0, reduction="mean"):
    """Pure-JAX f32 reference mirroring the PyTorch code."""
    p = jax.nn.sigmoid(pred.astype(jnp.float32)).reshape(pred.shape[0], -1)
    t = target.astype(jnp.float32).reshape(target.shape[0], -1)
    intersection = jnp.sum(p * t, axis=-1)
    total = jnp.sum(p + t, axis=-1)
    union = total - intersection
    loss = 1.0 - intersection / (union + 1e-6)
    if reduction == "mean":
        loss = jnp.mean(loss)
    elif reduction == "sum":
        loss = jnp.sum(loss)
    return loss_weight * loss


if __name__ == "__main__":
    key = jax.random.PRNGKey(0)

    def check(n, h, w, seed, loss_weight=1.0, reduction="mean", **kwargs):
        k1, k2 = jax.random.split(jax.random.fold_in(key, seed))
        pred = jax.random.normal(k1, (n, 1, h, w), dtype=jnp.float32)
        target = (jax.random.uniform(k2, (n, h, w)) > 0.5).astype(jnp.float32)
        got = jax.block_until_ready(
            sod_iou_loss(pred, target, loss_weight=loss_weight,
                         reduction=reduction, **kwargs))
        ref = _reference_iou_loss(pred, target, loss_weight=loss_weight,
                                  reduction=reduction)
        assert jnp.allclose(got, ref, atol=1e-4, rtol=1e-4), (n, h, w, got, ref)

    # 1) fast path (H*W % 2048 == 0): zero-copy reshape, no mask, sblk=2
    check(2, 64, 32, 0)
    # 2) ragged H*W -> negative-padded pred path, sblk=3
    check(3, 13, 11, 1)
    # 3) multiple HW chunks -> exercises the grid-reduction accumulation path
    check(2, 64, 64, 2, max_chunk_lanes=128)
    # 4) per-sample reduction + loss_weight on the ragged path
    check(4, 16, 16, 3, reduction="none", loss_weight=2.0)
    # 5) prime batch (sblk falls back to 1) + 'sum' reduction
    check(5, 24, 24, 4, reduction="sum")

    print("KERNEL_OK")
</pallas_src>

<mosaic_0001>
module attributes {stable_mosaic.version = 11 : i64} {
  func.func @_iou_loss_kernel(%arg0: i32, %arg1: i32, %arg2: memref<32x128xf32, #tpu.memory_space<vmem>>, %arg3: memref<32x128xf32, #tpu.memory_space<vmem>>, %arg4: memref<1x2x128xf32, #tpu.memory_space<vmem>>, %arg5: memref<32x128xf32, #tpu.memory_space<vmem>>, %arg6: memref<32x128xf32, #tpu.memory_space<vmem>>) attributes {dimension_semantics = [#tpu.dimension_semantics<parallel>, #tpu.dimension_semantics<arbitrary>], iteration_bounds = array<i64: 1, 1>, scalar_prefetch = 0 : i64, scratch_operands = 2 : i64, tpu.core_type = #tpu.core_type<tc>, window_params = [{transform_indices = @transform_0, window_bounds = array<i64: 32, 128>}, {transform_indices = @transform_1, window_bounds = array<i64: 32, 128>}, {transform_indices = @transform_2, window_bounds = array<i64: 1, 2, 128>}]} {
    %c0_i32 = arith.constant 0 : i32
    %0 = arith.cmpi eq, %arg1, %c0_i32 : i32
    %1 = arith.extui %0 : i1 to i32
    %c0_i32_0 = arith.constant 0 : i32
    %2 = arith.cmpi ne, %1, %c0_i32_0 : i32
    scf.if %2 {
      %cst_16 = arith.constant 0.000000e+00 : f32
      %25 = vector.broadcast %cst_16 : f32 to vector<32x128xf32>
      %c0_17 = arith.constant 0 : index
      %c0_18 = arith.constant 0 : index
      %26 = vector.load %arg5[%c0_17, %c0_18] : memref<32x128xf32, #tpu.memory_space<vmem>>, vector<32x128xf32>
      tpu.vector_store %arg5[%c0_17, %c0_18], %25 {strides = array<i32>} : memref<32x128xf32, #tpu.memory_space<vmem>>, vector<32x128xf32>,
      %cst_19 = arith.constant 0.000000e+00 : f32
      %27 = vector.broadcast %cst_19 : f32 to vector<32x128xf32>
      %c0_20 = arith.constant 0 : index
      %c0_21 = arith.constant 0 : index
      %28 = vector.load %arg6[%c0_20, %c0_21] : memref<32x128xf32, #tpu.memory_space<vmem>>, vector<32x128xf32>
      tpu.vector_store %arg6[%c0_20, %c0_21], %27 {strides = array<i32>} : memref<32x128xf32, #tpu.memory_space<vmem>>, vector<32x128xf32>,
    } else {
    }
    %cst = arith.constant 0.000000e+00 : f32
    %3 = vector.broadcast %cst : f32 to vector<32x128xf32>
    %cst_1 = arith.constant 0.000000e+00 : f32
    %4 = vector.broadcast %cst_1 : f32 to vector<32x128xf32>
    %c0 = arith.constant 0 : index
    %c0_2 = arith.constant 0 : index
    %5 = vector.load %arg2[%c0, %c0_2] : memref<32x128xf32, #tpu.memory_space<vmem>>, vector<32x128xf32>
    %6 = arith.negf %5 : vector<32x128xf32>
    %7 = math.exp %6 : vector<32x128xf32>
    %cst_3 = arith.constant 1.000000e+00 : f32
    %8 = vector.broadcast %cst_3 : f32 to vector<32x128xf32>
    %9 = arith.addf %8, %7 : vector<32x128xf32>
    %10 = arith.divf %8, %9 : vector<32x128xf32>
    %c0_4 = arith.constant 0 : index
    %c0_5 = arith.constant 0 : index
    %11 = vector.load %arg3[%c0_4, %c0_5] : memref<32x128xf32, #tpu.memory_space<vmem>>, vector<32x128xf32>
    %12 = arith.mulf %10, %11 : vector<32x128xf32>
    %13 = arith.addf %3, %12 : vector<32x128xf32>
    %14 = arith.addf %10, %11 : vector<32x128xf32>
    %15 = arith.addf %4, %14 : vector<32x128xf32>
    %c0_6 = arith.constant 0 : index
    %c0_7 = arith.constant 0 : index
    %16 = vector.load %arg5[%c0_6, %c0_7] : memref<32x128xf32, #tpu.memory_space<vmem>>, vector<32x128xf32>
    %17 = arith.addf %16, %13 : vector<32x128xf32>
    %c0_8 = arith.constant 0 : index
    %c0_9 = arith.constant 0 : index
    %18 = vector.load %arg5[%c0_8, %c0_9] : memref<32x128xf32, #tpu.memory_space<vmem>>, vector<32x128xf32>
    tpu.vector_store %arg5[%c0_8, %c0_9], %17 {strides = array<i32>} : memref<32x128xf32, #tpu.memory_space<vmem>>, vector<32x128xf32>,
    %c0_10 = arith.constant 0 : index
    %c0_11 = arith.constant 0 : index
    %19 = vector.load %arg6[%c0_10, %c0_11] : memref<32x128xf32, #tpu.memory_space<vmem>>, vector<32x128xf32>
    %20 = arith.addf %19, %15 : vector<32x128xf32>
    %c0_12 = arith.constant 0 : index
    %c0_13 = arith.constant 0 : index
    %21 = vector.load %arg6[%c0_12, %c0_13] : memref<32x128xf32, #tpu.memory_space<vmem>>, vector<32x128xf32>
    tpu.vector_store %arg6[%c0_12, %c0_13], %20 {strides = array<i32>} : memref<32x128xf32, #tpu.memory_space<vmem>>, vector<32x128xf32>,
    %c0_i32_14 = arith.constant 0 : i32
    %22 = arith.cmpi eq, %arg1, %c0_i32_14 : i32
    %23 = arith.extui %22 : i1 to i32
    %c0_i32_15 = arith.constant 0 : i32
    %24 = arith.cmpi ne, %23, %c0_i32_15 : i32
    scf.if %24 {
      %c0_16 = arith.constant 0 : index
      %c0_17 = arith.constant 0 : index
      %25 = vector.load %arg5[%c0_16, %c0_17] : memref<32x128xf32, #tpu.memory_space<vmem>>, vector<16x128xf32>
      %26 = vector.shape_cast %25 : vector<16x128xf32> to vector<1x16x128xf32>
      %cst_18 = arith.constant dense<0.000000e+00> : vector<1xf32>
      %27 = vector.multi_reduction <add>, %26, %cst_18 [1, 2] : vector<1x16x128xf32> to vector<1xf32>
      %28 = vector.shape_cast %27 : vector<1xf32> to vector<1x1x1xf32>
      %29 = vector.extract %28[0, 0, 0] : f32 from vector<1x1x1xf32>
      %c0_19 = arith.constant 0 : index
      %c0_20 = arith.constant 0 : index
      %30 = vector.load %arg6[%c0_19, %c0_20] : memref<32x128xf32, #tpu.memory_space<vmem>>, vector<16x128xf32>
      %31 = vector.shape_cast %30 : vector<16x128xf32> to vector<1x16x128xf32>
      %cst_21 = arith.constant dense<0.000000e+00> : vector<1xf32>
      %32 = vector.multi_reduction <add>, %31, %cst_21 [1, 2] : vector<1x16x128xf32> to vector<1xf32>
      %33 = vector.shape_cast %32 : vector<1xf32> to vector<1x1x1xf32>
      %34 = vector.extract %33[0, 0, 0] : f32 from vector<1x1x1xf32>
      %35 = arith.subf %34, %29 : f32
      %cst_22 = arith.constant 9.99999997E-7 : f32
      %36 = arith.addf %35, %cst_22 : f32
      %37 = arith.divf %29, %36 : f32
      %cst_23 = arith.constant 1.000000e+00 : f32
      %38 = arith.subf %cst_23, %37 : f32
      %39 = vector.broadcast %38 : f32 to vector<1x1x128xf32>
      %c0_24 = arith.constant 0 : index
      %c0_25 = arith.constant 0 : index
      %c0_26 = arith.constant 0 : index
      %40 = vector.load %arg4[%c0_24, %c0_25, %c0_26] : memref<1x2x128xf32, #tpu.memory_space<vmem>>, vector<1x1x128xf32>
      tpu.vector_store %arg4[%c0_24, %c0_25, %c0_26], %39 {strides = array<i32>} : memref<1x2x128xf32, #tpu.memory_space<vmem>>, vector<1x1x128xf32>,
      %c16 = arith.constant 16 : index
      %c0_27 = arith.constant 0 : index
      %41 = vector.load %arg5[%c16, %c0_27] : memref<32x128xf32, #tpu.memory_space<vmem>>, vector<16x128xf32>
      %42 = vector.shape_cast %41 : vector<16x128xf32> to vector<1x16x128xf32>
      %cst_28 = arith.constant dense<0.000000e+00> : vector<1xf32>
      %43 = vector.multi_reduction <add>, %42, %cst_28 [1, 2] : vector<1x16x128xf32> to vector<1xf32>
      %44 = vector.shape_cast %43 : vector<1xf32> to vector<1x1x1xf32>
      %45 = vector.extract %44[0, 0, 0] : f32 from vector<1x1x1xf32>
      %c16_29 = arith.constant 16 : index
      %c0_30 = arith.constant 0 : index
      %46 = vector.load %arg6[%c16_29, %c0_30] : memref<32x128xf32, #tpu.memory_space<vmem>>, vector<16x128xf32>
      %47 = vector.shape_cast %46 : vector<16x128xf32> to vector<1x16x128xf32>
      %cst_31 = arith.constant dense<0.000000e+00> : vector<1xf32>
      %48 = vector.multi_reduction <add>, %47, %cst_31 [1, 2] : vector<1x16x128xf32> to vector<1xf32>
      %49 = vector.shape_cast %48 : vector<1xf32> to vector<1x1x1xf32>
      %50 = vector.extract %49[0, 0, 0] : f32 from vector<1x1x1xf32>
      %51 = arith.subf %50, %45 : f32
      %cst_32 = arith.constant 9.99999997E-7 : f32
      %52 = arith.addf %51, %cst_32 : f32
      %53 = arith.divf %45, %52 : f32
      %cst_33 = arith.constant 1.000000e+00 : f32
      %54 = arith.subf %cst_33, %53 : f32
      %55 = vector.broadcast %54 : f32 to vector<1x1x128xf32>
      %c0_34 = arith.constant 0 : index
      %c1 = arith.constant 1 : index
      %c0_35 = arith.constant 0 : index
      %56 = vector.load %arg4[%c0_34, %c1, %c0_35] : memref<1x2x128xf32, #tpu.memory_space<vmem>>, vector<1x1x128xf32>
      tpu.vector_store %arg4[%c0_34, %c1, %c0_35], %55 {strides = array<i32>} : memref<1x2x128xf32, #tpu.memory_space<vmem>>, vector<1x1x128xf32>,
    } else {
    }
    return
  }
  func.func @transform_0(%arg0: i32, %arg1: i32) -> (i32, i32) {
    %c0_i32 = arith.constant 0 : i32
    return %arg0, %arg1 : i32, i32
  }
  func.func @transform_1(%arg0: i32, %arg1: i32) -> (i32, i32) {
    %c0_i32 = arith.constant 0 : i32
    return %arg0, %arg1 : i32, i32
  }
  func.func @transform_2(%arg0: i32, %arg1: i32) -> (i32, i32, i32) {
    %c0_i32 = arith.constant 0 : i32
    %c0_i32_0 = arith.constant 0 : i32
    %c0_i32_1 = arith.constant 0 : i32
    return %arg0, %c0_i32, %c0_i32_0 : i32, i32, i32
  }
}

</mosaic_0001>

<llo_original>
// kernel: tpu_custom_call.1
$region0: #{tpu_custom_call.1}
  #allocation0 [shape = 'u32[]', space=smem, size = 0x4, offset = 0x4, fixed_abs, tag = 'smem constant byte address 0x4 - core index']
  #allocation1 [shape = 'u32[144,128]{1,0:T(1,128)}', space=vmem, size = 0x12000, scoped, tag = 'internal scratch']
  #allocation2 [shape = 'f32[32,128]{1,0:T(8,128)}', space=vmem, size = 0x4000, scoped, tag = 'scratch operand']
  #allocation3 [shape = 'f32[32,128]{1,0:T(8,128)}', space=vmem, size = 0x4000, scoped, tag = 'scratch operand']
  %s0 = inlined_call_operand.hbm [shape: f32[32,128], index: 0, kind: input, shape index: {}]
  %s1 = inlined_call_operand.hbm [shape: f32[32,128], index: 1, kind: input, shape index: {}]
  %s2 = inlined_call_operand.hbm [shape: f32[1,2,128], index: 2, kind: output, shape index: {}]
  %s3 = sld [smem:[#allocation0]]
  $region34: #{tpu_custom_call.1} parent=0
    _
  %s5 = ssub.s32 1, %s3
  %s6 = scalar_select 0, %s5, %s3
  $region1: #{tpu_custom_call.1} parent=0
    #allocation4 [shape = 'u8[16384]{0}', space=vmem, size = 0x4000, scoped, tag = 'input window, operand 0, single buffered']
    #allocation5 [shape = 's32[1]{0}', space=sflag, size = 0x4, scoped, tag = 'scoped memory for tpu_custom_call.1']
    #allocation6 [shape = 's32[1]{0}', space=sflag, size = 0x4, scoped, tag = 'scoped memory for tpu_custom_call.1']
    #allocation7 [shape = 'u8[16384]{0}', space=vmem, size = 0x4000, scoped, tag = 'input window, operand 1, single buffered']
    #allocation8 [shape = 's32[1]{0}', space=sflag, size = 0x4, scoped, tag = 'scoped memory for tpu_custom_call.1']
    #allocation9 [shape = 'u8[1024]{0}', space=vmem, size = 0x400, scoped, tag = 'output window, operand 0, single buffered']
    %7 = vsyncpa [#allocation5], 0
    %8 = vsyncpa [#allocation8], 0
    %9 = vsyncpa [#allocation6], 0
    // Predicated region
    $region2: #{tpu_custom_call.1} parent=1 // pred_check
      _
    $region3: #{tpu_custom_call.1} parent=1 // pred_check_branch
      %11 = sbr.rel (0) target = $region5
    $region4: #{tpu_custom_call.1} parent=1 // pred_region
      %s13 = ssub.s32 512, 512
      %14 = vsyncadd [#allocation5], %s13
      %s15 = sshll.u32 [#allocation4], 4
      %s16 = int_to_ptr.vmem [resolvable:$true] %s15
      %21 = dma.hbm_to_vmem [thread:$0]  %s0, 512, %s16, [#allocation5], 128, 128, 8
    $region5: #{tpu_custom_call.1} parent=1 // pred_fallthru
      _
    // Predicated region
    $region6: #{tpu_custom_call.1} parent=1 // pred_check
      _
    $region7: #{tpu_custom_call.1} parent=1 // pred_check_branch
      %23 = sbr.rel (0) target = $region9
    $region8: #{tpu_custom_call.1} parent=1 // pred_region
      %s25 = ssub.s32 512, 512
      %26 = vsyncadd [#allocation8], %s25
      %s27 = sshll.u32 [#allocation7], 4
      %s28 = int_to_ptr.vmem [resolvable:$true] %s27
      %33 = dma.hbm_to_vmem [thread:$0]  %s1, 512, %s28, [#allocation8], 128, 128, 8
    $region9: #{tpu_custom_call.1} parent=1 // pred_fallthru
      _
    // Predicated region
    $region10: #{tpu_custom_call.1} parent=1 // pred_check
      _
    $region11: #{tpu_custom_call.1} parent=1 // pred_check_branch
      %35 = sbr.rel (0) target = $region13
    $region12: #{tpu_custom_call.1} parent=1 // pred_region
      %36 = dma.done [#allocation5], 512
    $region13: #{tpu_custom_call.1} parent=1 // pred_fallthru
      _
    // Predicated region
    $region14: #{tpu_custom_call.1} parent=1 // pred_check
      _
    $region15: #{tpu_custom_call.1} parent=1 // pred_check_branch
      %38 = sbr.rel (0) target = $region17
    $region16: #{tpu_custom_call.1} parent=1 // pred_region
      %39 = dma.done [#allocation8], 512
    $region17: #{tpu_custom_call.1} parent=1 // pred_fallthru
      _
    %p40 = scmp.eq.s32.totalorder 0, 0
    // Predicated region
    $region18: #{tpu_custom_call.1} parent=1 // pred_check
      %p41 = pneg %p40
    $region19: #{tpu_custom_call.1} parent=1 // pred_check_branch
      %43 = sbr.rel (%p41) target = $region21
    $region20: #{tpu_custom_call.1} parent=1 // pred_region
      %44 = vst [vmem:[#allocation2] sm:$0xff] 0.0
      %45 = vst [vmem:[#allocation2 + $0x8] sm:$0xff] 0.0
      %46 = vst [vmem:[#allocation2 + $0x10] sm:$0xff] 0.0
      %47 = vst [vmem:[#allocation2 + $0x18] sm:$0xff] 0.0
      %48 = vst [vmem:[#allocation3] sm:$0xff] 0.0
      %49 = vst [vmem:[#allocation3 + $0x8] sm:$0xff] 0.0
      %50 = vst [vmem:[#allocation3 + $0x10] sm:$0xff] 0.0
      %51 = vst [vmem:[#allocation3 + $0x18] sm:$0xff] 0.0
    $region21: #{tpu_custom_call.1} parent=1 // pred_fallthru
      _
    %v52 = vld [vmem:[#allocation4] sm:$0xff]
    %v53 = vld [vmem:[#allocation4 + $0x8] sm:$0xff]
    %v54 = vld [vmem:[#allocation4 + $0x10] sm:$0xff]
    %v55 = vld [vmem:[#allocation4 + $0x18] sm:$0xff]
    %v56 = vxor.u32 %v52, 2147483648
    %v57 = vxor.u32 %v53, 2147483648
    %v58 = vxor.u32 %v54, 2147483648
    %v59 = vxor.u32 %v55, 2147483648
    %v60 = vmul.f32 %v56, 1.442695
    %v61 = vpow.pop %v60
    %v62 = vmul.f32 %v57, 1.442695
    %v63 = vpow.pop %v62
    %v64 = vmul.f32 %v58, 1.442695
    %v65 = vpow.pop %v64
    %v66 = vmul.f32 %v59, 1.442695
    %v67 = vpow.pop %v66
    %v68 = vadd.f32 %v61, 1.0
    %v69 = vadd.f32 %v63, 1.0
    %v70 = vadd.f32 %v65, 1.0
    %v71 = vadd.f32 %v67, 1.0
    %v72 = vrcp.pop %v68
    %v73 = vmul.f32 1.0, %v72
    %v74 = vrcp.pop %v69
    %v75 = vmul.f32 1.0, %v74
    %v76 = vrcp.pop %v70
    %v77 = vmul.f32 1.0, %v76
    %v78 = vrcp.pop %v71
    %v79 = vmul.f32 1.0, %v78
    %v80 = vld [vmem:[#allocation7] sm:$0xff]
    %v81 = vld [vmem:[#allocation7 + $0x8] sm:$0xff]
    %v82 = vld [vmem:[#allocation7 + $0x10] sm:$0xff]
    %v83 = vld [vmem:[#allocation7 + $0x18] sm:$0xff]
    %v84 = vmul.f32 %v73, %v80
    %v85 = vmul.f32 %v75, %v81
    %v86 = vmul.f32 %v77, %v82
    %v87 = vmul.f32 %v79, %v83
    %v88 = vadd.f32 %v84, 0.0
    %v89 = vadd.f32 %v85, 0.0
    %v90 = vadd.f32 %v86, 0.0
    %v91 = vadd.f32 %v87, 0.0
    %v92 = vadd.f32 %v73, %v80
    %v93 = vadd.f32 %v75, %v81
    %v94 = vadd.f32 %v77, %v82
    %v95 = vadd.f32 %v79, %v83
    %v96 = vadd.f32 %v92, 0.0
    %v97 = vadd.f32 %v93, 0.0
    %v98 = vadd.f32 %v94, 0.0
    %v99 = vadd.f32 %v95, 0.0
    %v100 = vld [vmem:[#allocation2] sm:$0xff]
    %v101 = vld [vmem:[#allocation2 + $0x8] sm:$0xff]
    %v102 = vld [vmem:[#allocation2 + $0x10] sm:$0xff]
    %v103 = vld [vmem:[#allocation2 + $0x18] sm:$0xff]
    %v104 = vadd.f32 %v100, %v88
    %v105 = vadd.f32 %v101, %v89
    %v106 = vadd.f32 %v102, %v90
    %v107 = vadd.f32 %v103, %v91
    %108 = vst [vmem:[#allocation2] sm:$0xff] %v104
    %109 = vst [vmem:[#allocation2 + $0x8] sm:$0xff] %v105
    %110 = vst [vmem:[#allocation2 + $0x10] sm:$0xff] %v106
    %111 = vst [vmem:[#allocation2 + $0x18] sm:$0xff] %v107
    %v112 = vld [vmem:[#allocation3] sm:$0xff]
    %v113 = vld [vmem:[#allocation3 + $0x8] sm:$0xff]
    %v114 = vld [vmem:[#allocation3 + $0x10] sm:$0xff]
    %v115 = vld [vmem:[#allocation3 + $0x18] sm:$0xff]
    %v116 = vadd.f32 %v112, %v96
    %v117 = vadd.f32 %v113, %v97
    %v118 = vadd.f32 %v114, %v98
    %v119 = vadd.f32 %v115, %v99
    %120 = vst [vmem:[#allocation3] sm:$0xff] %v116
    %121 = vst [vmem:[#allocation3 + $0x8] sm:$0xff] %v117
    %122 = vst [vmem:[#allocation3 + $0x10] sm:$0xff] %v118
    %123 = vst [vmem:[#allocation3 + $0x18] sm:$0xff] %v119
    // Predicated region
    $region22: #{tpu_custom_call.1} parent=1 // pred_check
      %p124 = pneg %p40
    $region23: #{tpu_custom_call.1} parent=1 // pred_check_branch
      %126 = sbr.rel (%p124) target = $region25
    $region24: #{tpu_custom_call.1} parent=1 // pred_region
      %v127 = vld [vmem:[#allocation2] sm:$0xff]
      %v128 = vld [vmem:[#allocation2 + $0x8] sm:$0xff]
      %v129 = vadd.f32 %v127, %v128
      %130 = vadd.xlane.f32.xlu0 %v129
      %v131 = vpop.xlane.xlu0 %130
      %v132 = vrot.slane %v131, 4
      %v133 = vadd.f32 %v131, %v132
      %v134 = vrot.slane %v133, 2
      %v135 = vadd.f32 %v133, %v134
      %v136 = vrot.slane %v135, 1
      %v137 = vadd.f32 %v135, %v136
      %s138 = vtos %v137
      %v139 = vld [vmem:[#allocation3] sm:$0xff]
      %v140 = vld [vmem:[#allocation3 + $0x8] sm:$0xff]
      %v141 = vadd.f32 %v139, %v140
      %142 = vadd.xlane.f32.xlu0 %v141
      %v143 = vpop.xlane.xlu0 %142
      %v144 = vrot.slane %v143, 4
      %v145 = vadd.f32 %v143, %v144
      %v146 = vrot.slane %v145, 2
      %v147 = vadd.f32 %v145, %v146
      %v148 = vrot.slane %v147, 1
      %v149 = vadd.f32 %v147, %v148
      %s150 = vtos %v149
      %s151 = ssub.f32 %s150, %s138
      %s152 = sadd.f32 %s151, 1e-06
      %v153 = vstv %s152
      %v154 = vrcp.pop %v153
      %s155 = vtos %v154
      %s156 = smul.f32 %s138, %s155
      %s157 = ssub.f32 1.0, %s156
      %v158 = vstv %s157
      %159 = vst [vmem:[#allocation9] sm:$0x1] %v158
      %v160 = vld [vmem:[#allocation2 + $0x10] sm:$0xff]
      %v161 = vld [vmem:[#allocation2 + $0x18] sm:$0xff]
      %v162 = vadd.f32 %v160, %v161
      %163 = vadd.xlane.f32.xlu0 %v162
      %v164 = vpop.xlane.xlu0 %163
      %v165 = vrot.slane %v164, 4
      %v166 = vadd.f32 %v164, %v165
      %v167 = vrot.slane %v166, 2
      %v168 = vadd.f32 %v166, %v167
      %v169 = vrot.slane %v168, 1
      %v170 = vadd.f32 %v168, %v169
      %s171 = vtos %v170
      %v172 = vld [vmem:[#allocation3 + $0x10] sm:$0xff]
      %v173 = vld [vmem:[#allocation3 + $0x18] sm:$0xff]
      %v174 = vadd.f32 %v172, %v173
      %175 = vadd.xlane.f32.xlu0 %v174
      %v176 = vpop.xlane.xlu0 %175
      %v177 = vrot.slane %v176, 4
      %v178 = vadd.f32 %v176, %v177
      %v179 = vrot.slane %v178, 2
      %v180 = vadd.f32 %v178, %v179
      %v181 = vrot.slane %v180, 1
      %v182 = vadd.f32 %v180, %v181
      %s183 = vtos %v182
      %s184 = ssub.f32 %s183, %s171
      %s185 = sadd.f32 %s184, 1e-06
      %v186 = vstv %s185
      %v187 = vrcp.pop %v186
      %s188 = vtos %v187
      %s189 = smul.f32 %s171, %s188
      %s190 = ssub.f32 1.0, %s189
      %v191 = vstv %s190
      %192 = vst [vmem:[#allocation9 + $0x1] sm:$0x1] %v191
    $region25: #{tpu_custom_call.1} parent=1 // pred_fallthru
      _
    // Predicated region
    $region26: #{tpu_custom_call.1} parent=1 // pred_check
      _
    $region27: #{tpu_custom_call.1} parent=1 // pred_check_branch
      %194 = sbr.rel (0) target = $region29
    $region28: #{tpu_custom_call.1} parent=1 // pred_region
      %s196 = ssub.s32 32, 32
      %197 = vsyncadd [#allocation6], %s196
      %s199 = sshll.u32 [#allocation9], 4
      %s200 = int_to_ptr.vmem [resolvable:$true] %s199
      %202 = dma.vmem_to_hbm [thread:$0]  %s200, 32, %s2, [#allocation6]
    $region29: #{tpu_custom_call.1} parent=1 // pred_fallthru
      _
    // Predicated region
    $region30: #{tpu_custom_call.1} parent=1 // pred_check
      _
    $region31: #{tpu_custom_call.1} parent=1 // pred_check_branch
      %204 = sbr.rel (0) target = $region33
    $region32: #{tpu_custom_call.1} parent=1 // pred_region
      %205 = dma.done [#allocation6], 32
    $region33: #{tpu_custom_call.1} parent=1 // pred_fallthru
      _
    %206 = vsyncpa [#allocation5], 1
    %207 = vsyncpa [#allocation8], 1
    %208 = vsyncpa [#allocation6], 1

</llo_original>
